<compile_context>
chip_gen: v5e
topology: v5e:2x2
jax: 0.10.0
libtpu: 0.0.40
codegen_flags: <defaults>
</compile_context>

<pallas_src>
import jax
import jax.numpy as jnp
from jax.experimental import pallas as pl
from jax.experimental.pallas import tpu as pltpu  # noqa: F401  (kept for TPU-specific tuning hooks)

EPS = 1e-5
C_PAD = 128   # lane-dense channel padding (last dim multiple of 128)
P_ROWS = 8    # packed (bias, gamma, beta) rows padded to a full sublane tile


def gnn2_fused_kernel(x_ref, adj_ref, w_ref, p_ref, o_ref):
    """Fused 3x [GCNConv -> ReLU -> BatchNorm1d(train stats)] on batch element 0.

    x_ref:   (N, C_PAD)          node features, zero-padded channels
    adj_ref: (N, N)              dense adjacency of batch 0
    w_ref:   (3, C_PAD, C_PAD)   per-layer weights, zero-padded
    p_ref:   (3, P_ROWS, C_PAD)  rows 0/1/2 = bias / gamma / beta, zero-padded
    o_ref:   (N, C_PAD)
    """
    adj = adj_ref[...]
    h = x_ref[...]
    for layer in range(3):                      # unrolled at trace time
        w = w_ref[layer]                        # (C_PAD, C_PAD)
        p = p_ref[layer]                        # (P_ROWS, C_PAD)
        b, gamma, beta = p[0:1, :], p[1:2, :], p[2:3, :]

        # ---- GCNConv (normalize=False): adj @ (h @ W) + b  (MXU, f32 accumulation) ----
        hw = jnp.dot(h, w, preferred_element_type=jnp.float32)
        h = jnp.dot(adj, hw, preferred_element_type=jnp.float32) + b

        # ---- ReLU ----
        h = jnp.maximum(h, 0.0)

        # ---- BatchNorm1d over the node axis (training stats, biased variance),
        #      folded into a single fused multiply-add. ----
        mean = jnp.mean(h, axis=0, keepdims=True)
        var = jnp.mean(jnp.square(h - mean), axis=0, keepdims=True)
        s = gamma * jax.lax.rsqrt(var + EPS)    # rsqrt -> EUP slot
        h = h * s + (beta - mean * s)
    o_ref[...] = h


def _pad_last(a, cols):
    return jnp.pad(a, [(0, 0)] * (a.ndim - 1) + [(0, cols - a.shape[-1])])


def gnn2_forward(x, adj, params):
    """x: [B, N, C_in], adj: [B, N, N]  ->  [N, out_channels]."""
    h0 = x[0]          # only batch element 0 influences the module output
    a0 = adj[0]
    N = h0.shape[0]
    out_channels = params[-1][0].shape[1]

    x_pad = _pad_last(h0, C_PAD)
    w_stack = jnp.stack([
        jnp.pad(w, ((0, C_PAD - w.shape[0]), (0, C_PAD - w.shape[1])))
        for (w, _, _, _) in params
    ])                                                    # (3, C_PAD, C_PAD)
    p_stack = jnp.stack([
        jnp.pad(jnp.stack([b, gamma, beta]),
                ((0, P_ROWS - 3), (0, C_PAD - b.shape[0])))
        for (_, b, gamma, beta) in params
    ])                                                    # (3, P_ROWS, C_PAD)

    out_pad = pl.pallas_call(
        gnn2_fused_kernel,
        out_shape=jax.ShapeDtypeStruct((N, C_PAD), jnp.float32),
        # No grid: single fused invocation; whole arrays (< 300 KiB total) live in VMEM.
    )(x_pad, a0, w_stack, p_stack)
    return out_pad[:, :out_channels]


def init_gnn2_params(key, in_channels, hidden_channels, out_channels):
    """Deterministic parameter init matching GNN2.__init__ shapes."""
    dims = [(in_channels, hidden_channels),
            (hidden_channels, hidden_channels),
            (hidden_channels, out_channels)]
    params = []
    for (cin, cout) in dims:
        key, kw = jax.random.split(key)
        w = jax.random.normal(kw, (cin, cout), jnp.float32) * (1.0 / jnp.sqrt(cin))
        b = jnp.zeros((cout,), jnp.float32)          # GCNConv bias init
        gamma = jnp.ones((cout,), jnp.float32)       # BatchNorm1d weight
        beta = jnp.zeros((cout,), jnp.float32)       # BatchNorm1d bias
        params.append((w, b, gamma, beta))
    return params


if __name__ == "__main__":
    B, N = 2, 16
    in_channels, hidden_channels, out_channels = 8, 32, 16

    key = jax.random.PRNGKey(0)
    kx, kadj, kp = jax.random.split(key, 3)

    x = jax.random.normal(kx, (B, N, in_channels), jnp.float32)
    # symmetric-ish dense adjacency with self loops
    a = jax.random.uniform(kadj, (B, N, N), jnp.float32)
    adj = (a + jnp.swapaxes(a, -1, -2)) * 0.5 + jnp.eye(N, dtype=jnp.float32)[None]

    params = init_gnn2_params(kp, in_channels, hidden_channels, out_channels)

    out = gnn2_forward(x, adj, params)
    out = jax.block_until_ready(out)
    assert out.shape == (N, out_channels), out.shape
    assert jnp.all(jnp.isfinite(out))
    print("KERNEL_OK")
</pallas_src>

<mosaic_0001>
module attributes {stable_mosaic.version = 11 : i64} {
  func.func @gnn2_fused_kernel(%arg0: memref<16x128xf32, #tpu.memory_space<vmem>>, %arg1: memref<16x16xf32, #tpu.memory_space<vmem>>, %arg2: memref<3x128x128xf32, #tpu.memory_space<vmem>>, %arg3: memref<3x8x128xf32, #tpu.memory_space<vmem>>, %arg4: memref<16x128xf32, #tpu.memory_space<vmem>>) attributes {dimension_semantics = [], scalar_prefetch = 0 : i64, scratch_operands = 0 : i64, tpu.core_type = #tpu.core_type<tc>} {
    %c0 = arith.constant 0 : index
    %c0_0 = arith.constant 0 : index
    %0 = vector.load %arg1[%c0, %c0_0] : memref<16x16xf32, #tpu.memory_space<vmem>>, vector<16x16xf32>
    %c0_1 = arith.constant 0 : index
    %c0_2 = arith.constant 0 : index
    %1 = vector.load %arg0[%c0_1, %c0_2] : memref<16x128xf32, #tpu.memory_space<vmem>>, vector<16x128xf32>
    %c0_3 = arith.constant 0 : index
    %c0_4 = arith.constant 0 : index
    %c0_5 = arith.constant 0 : index
    %2 = vector.load %arg2[%c0_3, %c0_4, %c0_5] : memref<3x128x128xf32, #tpu.memory_space<vmem>>, vector<1x128x128xf32>
    %3 = vector.shape_cast %2 : vector<1x128x128xf32> to vector<128x128xf32>
    %c0_6 = arith.constant 0 : index
    %c0_7 = arith.constant 0 : index
    %c0_8 = arith.constant 0 : index
    %4 = vector.load %arg3[%c0_6, %c0_7, %c0_8] : memref<3x8x128xf32, #tpu.memory_space<vmem>>, vector<1x8x128xf32>
    %5 = vector.shape_cast %4 : vector<1x8x128xf32> to vector<8x128xf32>
    %6 = vector.extract_strided_slice %5 {offsets = [0, 0], sizes = [1, 128], strides = [1, 1]} : vector<8x128xf32> to vector<1x128xf32>
    %7 = vector.extract_strided_slice %5 {offsets = [1, 0], sizes = [1, 128], strides = [1, 1]} : vector<8x128xf32> to vector<1x128xf32>
    %8 = vector.extract_strided_slice %5 {offsets = [2, 0], sizes = [1, 128], strides = [1, 1]} : vector<8x128xf32> to vector<1x128xf32>
    %cst = arith.constant dense<0.000000e+00> : vector<16x128xf32>
    %9 = tpu.matmul %1, %3, %cst {dimension_numbers = #tpu.dot_dimension_numbers<[1], [0], [0], [1], [0, 0, 1, 1], [], []>} : vector<16x128xf32>, vector<128x128xf32>, vector<16x128xf32> -> vector<16x128xf32>
    %cst_9 = arith.constant dense<0.000000e+00> : vector<16x128xf32>
    %10 = tpu.matmul %0, %9, %cst_9 {dimension_numbers = #tpu.dot_dimension_numbers<[1], [0], [0], [1], [0, 0, 1, 1], [], []>} : vector<16x16xf32>, vector<16x128xf32>, vector<16x128xf32> -> vector<16x128xf32>
    %11 = vector.broadcast %6 : vector<1x128xf32> to vector<16x128xf32>
    %12 = arith.addf %10, %11 : vector<16x128xf32>
    %cst_10 = arith.constant 0.000000e+00 : f32
    %13 = vector.broadcast %cst_10 : f32 to vector<16x128xf32>
    %14 = arith.maximumf %12, %13 : vector<16x128xf32>
    %cst_11 = arith.constant dense<0.000000e+00> : vector<128xf32>
    %15 = vector.multi_reduction <add>, %14, %cst_11 [0] : vector<16x128xf32> to vector<128xf32>
    %16 = vector.shape_cast %15 : vector<128xf32> to vector<1x128xf32>
    %cst_12 = arith.constant 1.600000e+01 : f32
    %17 = vector.broadcast %cst_12 : f32 to vector<1x128xf32>
    %18 = arith.divf %16, %17 : vector<1x128xf32>
    %19 = vector.broadcast %18 : vector<1x128xf32> to vector<16x128xf32>
    %20 = arith.subf %14, %19 : vector<16x128xf32>
    %21 = arith.mulf %20, %20 : vector<16x128xf32>
    %cst_13 = arith.constant dense<0.000000e+00> : vector<128xf32>
    %22 = vector.multi_reduction <add>, %21, %cst_13 [0] : vector<16x128xf32> to vector<128xf32>
    %23 = vector.shape_cast %22 : vector<128xf32> to vector<1x128xf32>
    %cst_14 = arith.constant 1.600000e+01 : f32
    %24 = vector.broadcast %cst_14 : f32 to vector<1x128xf32>
    %25 = arith.divf %23, %24 : vector<1x128xf32>
    %cst_15 = arith.constant 9.99999974E-6 : f32
    %26 = vector.broadcast %cst_15 : f32 to vector<1x128xf32>
    %27 = arith.addf %25, %26 : vector<1x128xf32>
    %28 = math.rsqrt %27 : vector<1x128xf32>
    %29 = arith.mulf %7, %28 : vector<1x128xf32>
    %30 = vector.broadcast %29 : vector<1x128xf32> to vector<16x128xf32>
    %31 = arith.mulf %14, %30 : vector<16x128xf32>
    %32 = arith.mulf %18, %29 : vector<1x128xf32>
    %33 = arith.subf %8, %32 : vector<1x128xf32>
    %34 = vector.broadcast %33 : vector<1x128xf32> to vector<16x128xf32>
    %35 = arith.addf %31, %34 : vector<16x128xf32>
    %c1 = arith.constant 1 : index
    %c0_16 = arith.constant 0 : index
    %c0_17 = arith.constant 0 : index
    %36 = vector.load %arg2[%c1, %c0_16, %c0_17] : memref<3x128x128xf32, #tpu.memory_space<vmem>>, vector<1x128x128xf32>
    %37 = vector.shape_cast %36 : vector<1x128x128xf32> to vector<128x128xf32>
    %c1_18 = arith.constant 1 : index
    %c0_19 = arith.constant 0 : index
    %c0_20 = arith.constant 0 : index
    %38 = vector.load %arg3[%c1_18, %c0_19, %c0_20] : memref<3x8x128xf32, #tpu.memory_space<vmem>>, vector<1x8x128xf32>
    %39 = vector.shape_cast %38 : vector<1x8x128xf32> to vector<8x128xf32>
    %40 = vector.extract_strided_slice %39 {offsets = [0, 0], sizes = [1, 128], strides = [1, 1]} : vector<8x128xf32> to vector<1x128xf32>
    %41 = vector.extract_strided_slice %39 {offsets = [1, 0], sizes = [1, 128], strides = [1, 1]} : vector<8x128xf32> to vector<1x128xf32>
    %42 = vector.extract_strided_slice %39 {offsets = [2, 0], sizes = [1, 128], strides = [1, 1]} : vector<8x128xf32> to vector<1x128xf32>
    %cst_21 = arith.constant dense<0.000000e+00> : vector<16x128xf32>
    %43 = tpu.matmul %35, %37, %cst_21 {dimension_numbers = #tpu.dot_dimension_numbers<[1], [0], [0], [1], [0, 0, 1, 1], [], []>} : vector<16x128xf32>, vector<128x128xf32>, vector<16x128xf32> -> vector<16x128xf32>
    %cst_22 = arith.constant dense<0.000000e+00> : vector<16x128xf32>
    %44 = tpu.matmul %0, %43, %cst_22 {dimension_numbers = #tpu.dot_dimension_numbers<[1], [0], [0], [1], [0, 0, 1, 1], [], []>} : vector<16x16xf32>, vector<16x128xf32>, vector<16x128xf32> -> vector<16x128xf32>
    %45 = vector.broadcast %40 : vector<1x128xf32> to vector<16x128xf32>
    %46 = arith.addf %44, %45 : vector<16x128xf32>
    %cst_23 = arith.constant 0.000000e+00 : f32
    %47 = vector.broadcast %cst_23 : f32 to vector<16x128xf32>
    %48 = arith.maximumf %46, %47 : vector<16x128xf32>
    %cst_24 = arith.constant dense<0.000000e+00> : vector<128xf32>
    %49 = vector.multi_reduction <add>, %48, %cst_24 [0] : vector<16x128xf32> to vector<128xf32>
    %50 = vector.shape_cast %49 : vector<128xf32> to vector<1x128xf32>
    %cst_25 = arith.constant 1.600000e+01 : f32
    %51 = vector.broadcast %cst_25 : f32 to vector<1x128xf32>
    %52 = arith.divf %50, %51 : vector<1x128xf32>
    %53 = vector.broadcast %52 : vector<1x128xf32> to vector<16x128xf32>
    %54 = arith.subf %48, %53 : vector<16x128xf32>
    %55 = arith.mulf %54, %54 : vector<16x128xf32>
    %cst_26 = arith.constant dense<0.000000e+00> : vector<128xf32>
    %56 = vector.multi_reduction <add>, %55, %cst_26 [0] : vector<16x128xf32> to vector<128xf32>
    %57 = vector.shape_cast %56 : vector<128xf32> to vector<1x128xf32>
    %cst_27 = arith.constant 1.600000e+01 : f32
    %58 = vector.broadcast %cst_27 : f32 to vector<1x128xf32>
    %59 = arith.divf %57, %58 : vector<1x128xf32>
    %cst_28 = arith.constant 9.99999974E-6 : f32
    %60 = vector.broadcast %cst_28 : f32 to vector<1x128xf32>
    %61 = arith.addf %59, %60 : vector<1x128xf32>
    %62 = math.rsqrt %61 : vector<1x128xf32>
    %63 = arith.mulf %41, %62 : vector<1x128xf32>
    %64 = vector.broadcast %63 : vector<1x128xf32> to vector<16x128xf32>
    %65 = arith.mulf %48, %64 : vector<16x128xf32>
    %66 = arith.mulf %52, %63 : vector<1x128xf32>
    %67 = arith.subf %42, %66 : vector<1x128xf32>
    %68 = vector.broadcast %67 : vector<1x128xf32> to vector<16x128xf32>
    %69 = arith.addf %65, %68 : vector<16x128xf32>
    %c2 = arith.constant 2 : index
    %c0_29 = arith.constant 0 : index
    %c0_30 = arith.constant 0 : index
    %70 = vector.load %arg2[%c2, %c0_29, %c0_30] : memref<3x128x128xf32, #tpu.memory_space<vmem>>, vector<1x128x128xf32>
    %71 = vector.shape_cast %70 : vector<1x128x128xf32> to vector<128x128xf32>
    %c2_31 = arith.constant 2 : index
    %c0_32 = arith.constant 0 : index
    %c0_33 = arith.constant 0 : index
    %72 = vector.load %arg3[%c2_31, %c0_32, %c0_33] : memref<3x8x128xf32, #tpu.memory_space<vmem>>, vector<1x8x128xf32>
    %73 = vector.shape_cast %72 : vector<1x8x128xf32> to vector<8x128xf32>
    %74 = vector.extract_strided_slice %73 {offsets = [0, 0], sizes = [1, 128], strides = [1, 1]} : vector<8x128xf32> to vector<1x128xf32>
    %75 = vector.extract_strided_slice %73 {offsets = [1, 0], sizes = [1, 128], strides = [1, 1]} : vector<8x128xf32> to vector<1x128xf32>
    %76 = vector.extract_strided_slice %73 {offsets = [2, 0], sizes = [1, 128], strides = [1, 1]} : vector<8x128xf32> to vector<1x128xf32>
    %cst_34 = arith.constant dense<0.000000e+00> : vector<16x128xf32>
    %77 = tpu.matmul %69, %71, %cst_34 {dimension_numbers = #tpu.dot_dimension_numbers<[1], [0], [0], [1], [0, 0, 1, 1], [], []>} : vector<16x128xf32>, vector<128x128xf32>, vector<16x128xf32> -> vector<16x128xf32>
    %cst_35 = arith.constant dense<0.000000e+00> : vector<16x128xf32>
    %78 = tpu.matmul %0, %77, %cst_35 {dimension_numbers = #tpu.dot_dimension_numbers<[1], [0], [0], [1], [0, 0, 1, 1], [], []>} : vector<16x16xf32>, vector<16x128xf32>, vector<16x128xf32> -> vector<16x128xf32>
    %79 = vector.broadcast %74 : vector<1x128xf32> to vector<16x128xf32>
    %80 = arith.addf %78, %79 : vector<16x128xf32>
    %cst_36 = arith.constant 0.000000e+00 : f32
    %81 = vector.broadcast %cst_36 : f32 to vector<16x128xf32>
    %82 = arith.maximumf %80, %81 : vector<16x128xf32>
    %cst_37 = arith.constant dense<0.000000e+00> : vector<128xf32>
    %83 = vector.multi_reduction <add>, %82, %cst_37 [0] : vector<16x128xf32> to vector<128xf32>
    %84 = vector.shape_cast %83 : vector<128xf32> to vector<1x128xf32>
    %cst_38 = arith.constant 1.600000e+01 : f32
    %85 = vector.broadcast %cst_38 : f32 to vector<1x128xf32>
    %86 = arith.divf %84, %85 : vector<1x128xf32>
    %87 = vector.broadcast %86 : vector<1x128xf32> to vector<16x128xf32>
    %88 = arith.subf %82, %87 : vector<16x128xf32>
    %89 = arith.mulf %88, %88 : vector<16x128xf32>
    %cst_39 = arith.constant dense<0.000000e+00> : vector<128xf32>
    %90 = vector.multi_reduction <add>, %89, %cst_39 [0] : vector<16x128xf32> to vector<128xf32>
    %91 = vector.shape_cast %90 : vector<128xf32> to vector<1x128xf32>
    %cst_40 = arith.constant 1.600000e+01 : f32
    %92 = vector.broadcast %cst_40 : f32 to vector<1x128xf32>
    %93 = arith.divf %91, %92 : vector<1x128xf32>
    %cst_41 = arith.constant 9.99999974E-6 : f32
    %94 = vector.broadcast %cst_41 : f32 to vector<1x128xf32>
    %95 = arith.addf %93, %94 : vector<1x128xf32>
    %96 = math.rsqrt %95 : vector<1x128xf32>
    %97 = arith.mulf %75, %96 : vector<1x128xf32>
    %98 = vector.broadcast %97 : vector<1x128xf32> to vector<16x128xf32>
    %99 = arith.mulf %82, %98 : vector<16x128xf32>
    %100 = arith.mulf %86, %97 : vector<1x128xf32>
    %101 = arith.subf %76, %100 : vector<1x128xf32>
    %102 = vector.broadcast %101 : vector<1x128xf32> to vector<16x128xf32>
    %103 = arith.addf %99, %102 : vector<16x128xf32>
    %c0_42 = arith.constant 0 : index
    %c0_43 = arith.constant 0 : index
    %104 = vector.load %arg4[%c0_42, %c0_43] : memref<16x128xf32, #tpu.memory_space<vmem>>, vector<16x128xf32>
    tpu.vector_store %arg4[%c0_42, %c0_43], %103 {strides = array<i32>} : memref<16x128xf32, #tpu.memory_space<vmem>>, vector<16x128xf32>,
    return
  }
}

</mosaic_0001>

<llo_original>
// kernel: tpu_custom_call.1
$region0: #{tpu_custom_call.1}
  #allocation0 [shape = 'u32[]', space=smem, size = 0x4, offset = 0x4, fixed_abs, tag = 'smem constant byte address 0x4 - core index']
  #allocation1 [shape = 'u32[72,128]{1,0:T(1,128)}', space=vmem, size = 0x9000, scoped, tag = 'internal scratch']
  %s0 = inlined_call_operand.hbm [shape: f32[16,128], index: 0, kind: input, shape index: {}]
  %s1 = inlined_call_operand.hbm [shape: f32[16,16], index: 1, kind: input, shape index: {}]
  %s2 = inlined_call_operand.hbm [shape: f32[3,128,128], index: 2, kind: input, shape index: {}]
  %s3 = inlined_call_operand.hbm [shape: f32[3,8,128], index: 3, kind: input, shape index: {}]
  %s4 = inlined_call_operand.hbm [shape: f32[16,128], index: 4, kind: output, shape index: {}]
  %s5 = sld [smem:[#allocation0]]
  $region42: #{tpu_custom_call.1} parent=0
    _
  %s7 = ssub.s32 1, %s5
  %s8 = scalar_select 0, %s7, %s5
  $region1: #{tpu_custom_call.1} parent=0
    #allocation2 [shape = 'u8[8192]{0}', space=vmem, size = 0x2000, scoped, tag = 'input window, operand 0, single buffered']
    #allocation3 [shape = 's32[1]{0}', space=sflag, size = 0x4, scoped, tag = 'scoped memory for tpu_custom_call.1']
    #allocation4 [shape = 's32[1]{0}', space=sflag, size = 0x4, scoped, tag = 'scoped memory for tpu_custom_call.1']
    #allocation5 [shape = 'u8[8192]{0}', space=vmem, size = 0x2000, scoped, tag = 'input window, operand 1, single buffered']
    #allocation6 [shape = 's32[1]{0}', space=sflag, size = 0x4, scoped, tag = 'scoped memory for tpu_custom_call.1']
    #allocation7 [shape = 'u8[196608]{0}', space=vmem, size = 0x30000, scoped, tag = 'input window, operand 2, single buffered']
    #allocation8 [shape = 'u8[12288]{0}', space=vmem, size = 0x3000, scoped, tag = 'input window, operand 3, single buffered']
    #allocation9 [shape = 's32[1]{0}', space=sflag, size = 0x4, scoped, tag = 'scoped memory for tpu_custom_call.1']
    #allocation10 [shape = 'u8[8192]{0}', space=vmem, size = 0x2000, scoped, tag = 'output window, operand 0, single buffered']
    %9 = vsyncpa [#allocation3], 0
    %10 = vsyncpa [#allocation6], 0
    %11 = vsyncpa [#allocation9], 0
    %12 = vsyncpa [#allocation4], 0
    // Predicated region
    $region2: #{tpu_custom_call.1} parent=1 // pred_check
      _
    $region3: #{tpu_custom_call.1} parent=1 // pred_check_branch
      %14 = sbr.rel (0) target = $region5
    $region4: #{tpu_custom_call.1} parent=1 // pred_region
      %16 = vsyncadd [#allocation3], 0
      %s17 = sshll.u32 %s0, 4
      %s18 = int_to_ptr.hbm [resolvable:$true] %s17
      %s19 = sshll.u32 [#allocation2], 4
      %s20 = int_to_ptr.vmem [resolvable:$true] %s19
      %25 = dma.hbm_to_vmem [thread:$0]  %s18, 256, %s20, [#allocation3], 128, 128, 8
    $region5: #{tpu_custom_call.1} parent=1 // pred_fallthru
      _
    // Predicated region
    $region6: #{tpu_custom_call.1} parent=1 // pred_check
      _
    $region7: #{tpu_custom_call.1} parent=1 // pred_check_branch
      %27 = sbr.rel (0) target = $region9
    $region8: #{tpu_custom_call.1} parent=1 // pred_region
      %29 = vsyncadd [#allocation6], 0
      %s30 = sshll.u32 %s1, 4
      %s31 = int_to_ptr.hbm [resolvable:$true] %s30
      %s32 = sshll.u32 [#allocation5], 4
      %s33 = int_to_ptr.vmem [resolvable:$true] %s32
      %38 = dma.hbm_to_vmem [thread:$0]  %s31, 256, %s33, [#allocation6], 128, 128, 8
    $region9: #{tpu_custom_call.1} parent=1 // pred_fallthru
      _
    // Predicated region
    $region10: #{tpu_custom_call.1} parent=1 // pred_check
      _
    $region11: #{tpu_custom_call.1} parent=1 // pred_check_branch
      %40 = sbr.rel (0) target = $region13
    $region12: #{tpu_custom_call.1} parent=1 // pred_region
      %42 = vsyncadd [#allocation6], 0
      %s43 = sshll.u32 %s2, 4
      %s44 = int_to_ptr.hbm [resolvable:$true] %s43
      %s45 = sshll.u32 [#allocation7], 4
      %s46 = int_to_ptr.vmem [resolvable:$true] %s45
      %51 = dma.hbm_to_vmem [thread:$0]  %s44, 6144, %s46, [#allocation6], 128, 128, 8
    $region13: #{tpu_custom_call.1} parent=1 // pred_fallthru
      _
    // Predicated region
    $region14: #{tpu_custom_call.1} parent=1 // pred_check
      _
    $region15: #{tpu_custom_call.1} parent=1 // pred_check_branch
      %53 = sbr.rel (0) target = $region17
    $region16: #{tpu_custom_call.1} parent=1 // pred_region
      %55 = vsyncadd [#allocation9], 0
      %s56 = sshll.u32 %s3, 4
      %s57 = int_to_ptr.hbm [resolvable:$true] %s56
      %s58 = sshll.u32 [#allocation8], 4
      %s59 = int_to_ptr.vmem [resolvable:$true] %s58
      %64 = dma.hbm_to_vmem [thread:$0]  %s57, 384, %s59, [#allocation9], 128, 128, 8
    $region17: #{tpu_custom_call.1} parent=1 // pred_fallthru
      _
    // Predicated region
    $region18: #{tpu_custom_call.1} parent=1 // pred_check
      _
    $region19: #{tpu_custom_call.1} parent=1 // pred_check_branch
      %66 = sbr.rel (0) target = $region21
    $region20: #{tpu_custom_call.1} parent=1 // pred_region
      %68 = dma.done [#allocation3], 256
    $region21: #{tpu_custom_call.1} parent=1 // pred_fallthru
      _
    // Predicated region
    $region22: #{tpu_custom_call.1} parent=1 // pred_check
      _
    $region23: #{tpu_custom_call.1} parent=1 // pred_check_branch
      %70 = sbr.rel (0) target = $region25
    $region24: #{tpu_custom_call.1} parent=1 // pred_region
      %72 = dma.done [#allocation6], 256
    $region25: #{tpu_custom_call.1} parent=1 // pred_fallthru
      _
    // Predicated region
    $region26: #{tpu_custom_call.1} parent=1 // pred_check
      _
    $region27: #{tpu_custom_call.1} parent=1 // pred_check_branch
      %74 = sbr.rel (0) target = $region29
    $region28: #{tpu_custom_call.1} parent=1 // pred_region
      %76 = dma.done [#allocation6], 6144
    $region29: #{tpu_custom_call.1} parent=1 // pred_fallthru
      _
    // Predicated region
    $region30: #{tpu_custom_call.1} parent=1 // pred_check
      _
    $region31: #{tpu_custom_call.1} parent=1 // pred_check_branch
      %78 = sbr.rel (0) target = $region33
    $region32: #{tpu_custom_call.1} parent=1 // pred_region
      %80 = dma.done [#allocation9], 384
    $region33: #{tpu_custom_call.1} parent=1 // pred_fallthru
      _
    %v81 = vld [vmem:[#allocation5] sm:$0xff]
    %v82 = vld [vmem:[#allocation5 + $0x8] sm:$0xff]
    %v83 = vld [vmem:[#allocation2] sm:$0xff]
    %v84 = vld [vmem:[#allocation2 + $0x8] sm:$0xff]
    %v85 = vld [vmem:[#allocation7] sm:$0xff]
    %v86 = vld [vmem:[#allocation7 + $0x8] sm:$0xff]
    %v87 = vld [vmem:[#allocation7 + $0x10] sm:$0xff]
    %v88 = vld [vmem:[#allocation7 + $0x18] sm:$0xff]
    %v89 = vld [vmem:[#allocation7 + $0x20] sm:$0xff]
    %v90 = vld [vmem:[#allocation7 + $0x28] sm:$0xff]
    %v91 = vld [vmem:[#allocation7 + $0x30] sm:$0xff]
    %v92 = vld [vmem:[#allocation7 + $0x38] sm:$0xff]
    %v93 = vld [vmem:[#allocation7 + $0x40] sm:$0xff]
    %v94 = vld [vmem:[#allocation7 + $0x48] sm:$0xff]
    %v95 = vld [vmem:[#allocation7 + $0x50] sm:$0xff]
    %v96 = vld [vmem:[#allocation7 + $0x58] sm:$0xff]
    %v97 = vld [vmem:[#allocation7 + $0x60] sm:$0xff]
    %v98 = vld [vmem:[#allocation7 + $0x68] sm:$0xff]
    %v99 = vld [vmem:[#allocation7 + $0x70] sm:$0xff]
    %v100 = vld [vmem:[#allocation7 + $0x78] sm:$0xff]
    %v101 = vld [vmem:[#allocation8] sm:$0xff]
    %102 = vmatpush.msra.mxu0 %v100
    %103 = vmatpush.msra.mxu0 %v99
    %104 = vmatpush.msra.mxu0 %v98
    %105 = vmatpush.msra.mxu0 %v97
    %106 = vmatpush.msra.mxu0 %v96
    %107 = vmatpush.msra.mxu0 %v95
    %108 = vmatpush.msra.mxu0 %v94
    %109 = vmatpush.msra.mxu0 %v93
    %110 = vmatpush.msra.mxu0 %v92
    %111 = vmatpush.msra.mxu0 %v91
    %112 = vmatpush.msra.mxu0 %v90
    %113 = vmatpush.msra.mxu0 %v89
    %114 = vmatpush.msra.mxu0 %v88
    %115 = vmatpush.msra.mxu0 %v87
    %116 = vmatpush.msra.mxu0 %v86
    %117 = vmatpush.msra.mxu0 %v85
    %118 = vmatmul.f32.gmra.mxu0 %v83
    %v119 = vpop.f32.mrf.mxu0
    %v120 = vadd.f32 0.0, %v119
    %121 = vmatmul.f32.gmra.mxu0 %v84
    %v122 = vpop.f32.mrf.mxu0
    %v123 = vadd.f32 0.0, %v122
    %124 = vdwg.mxu0
    %v125 = vperm.slane %v101, 0
    %vm126 = vcmask 130048
    %v128 = vsel %vm126, %v81, 0
    %v131 = vsel %vm126, %v82, 0
    %133 = vmatpush.msra.mxu0 0.0
    %134 = vmatpush.msra.mxu0 0.0
    %135 = vmatpush.msra.mxu0 0.0
    %136 = vmatpush.msra.mxu0 0.0
    %137 = vmatpush.msra.mxu0 0.0
    %138 = vmatpush.msra.mxu0 0.0
    %139 = vmatpush.msra.mxu0 0.0
    %140 = vmatpush.msra.mxu0 0.0
    %141 = vmatpush.msra.mxu0 0.0
    %142 = vmatpush.msra.mxu0 0.0
    %143 = vmatpush.msra.mxu0 0.0
    %144 = vmatpush.msra.mxu0 0.0
    %145 = vmatpush.msra.mxu0 0.0
    %146 = vmatpush.msra.mxu0 0.0
    %147 = vmatpush.msra.mxu0 %v123
    %148 = vmatpush.msra.mxu0 %v120
    %149 = vmatmul.f32.gmra.mxu0 %v128
    %v150 = vpop.f32.mrf.mxu0
    %v151 = vadd.f32 %v125, %v150
    %152 = vmatmul.f32.gmra.mxu0 %v131
    %v153 = vpop.f32.mrf.mxu0
    %v154 = vadd.f32 %v125, %v153
    %155 = vdwg.mxu0
    %v156 = vmax.f32 %v151, 0.0
    %v157 = vmax.f32 %v154, 0.0
    %v158 = vadd.f32 %v156, %v157
    %v159 = vrot.slane %v158, 4
    %v160 = vadd.f32 %v158, %v159
    %v161 = vrot.slane %v160, 2
    %v162 = vadd.f32 %v160, %v161
    %v163 = vrot.slane %v162, 1
    %v164 = vadd.f32 %v162, %v163
    %v165 = vrcp.pop 16.0
    %v166 = vmul.f32 16.0, %v165
    %v167 = vsub.f32 1.0, %v166
    %v168 = vmul.f32 %v165, %v167
    %v169 = vadd.f32 %v165, %v168
    %vm170 = vweird.f32 %v165
    %v171 = vsel %vm170, %v165, %v169
    %v172 = vmul.f32 %v164, %v171
    %v173 = vsub.f32 %v156, %v172
    %v174 = vsub.f32 %v157, %v172
    %v175 = vmul.f32 %v173, %v173
    %v176 = vmul.f32 %v174, %v174
    %v177 = vadd.f32 %v175, %v176
    %v178 = vrot.slane %v177, 4
    %v179 = vadd.f32 %v177, %v178
    %v180 = vrot.slane %v179, 2
    %v181 = vadd.f32 %v179, %v180
    %v182 = vrot.slane %v181, 1
    %v183 = vadd.f32 %v181, %v182
    %v184 = vmul.f32 %v183, %v171
    %v185 = vadd.f32 %v184, 1e-05
    %v186 = vrsqrt.pop %v185
    %v187 = vmul.f32 %v186, %v185
    %v188 = vmul.f32 %v187, %v186
    %v189 = vmul.f32 0.5, %v188
    %v190 = vsub.f32 1.5, %v189
    %v191 = vmul.f32 %v186, %v190
    %vm192 = vweird.f32 %v185
    %vm193 = vweird.f32 %v186
    %vm194 = vmor %vm192, %vm193
    %v195 = vsel %vm194, %v186, %v191
    %v196 = vmul.f32 %v101, %v195
    %v197 = vperm.slane %v196, 1
    %v198 = vmul.f32 %v156, %v197
    %v199 = vmul.f32 %v157, %v197
    %v200 = vmul.f32 %v172, %v196
    %v202 = vrot.slane %v200, 7
    %v204 = vsub.f32 %v101, %v202
    %v205 = vperm.slane %v204, 2
    %v206 = vadd.f32 %v198, %v205
    %v207 = vadd.f32 %v199, %v205
    %s208 = scalar_lea.vmem [#allocation7], 128
    %v209 = vld [vmem:[%s208] sm:$0xff]
    %v210 = vld [vmem:[%s208 + $0x8] sm:$0xff]
    %v211 = vld [vmem:[%s208 + $0x10] sm:$0xff]
    %v212 = vld [vmem:[%s208 + $0x18] sm:$0xff]
    %v213 = vld [vmem:[%s208 + $0x20] sm:$0xff]
    %v214 = vld [vmem:[%s208 + $0x28] sm:$0xff]
    %v215 = vld [vmem:[%s208 + $0x30] sm:$0xff]
    %v216 = vld [vmem:[%s208 + $0x38] sm:$0xff]
    %v217 = vld [vmem:[%s208 + $0x40] sm:$0xff]
    %v218 = vld [vmem:[%s208 + $0x48] sm:$0xff]
    %v219 = vld [vmem:[%s208 + $0x50] sm:$0xff]
    %v220 = vld [vmem:[%s208 + $0x58] sm:$0xff]
    %v221 = vld [vmem:[%s208 + $0x60] sm:$0xff]
    %v222 = vld [vmem:[%s208 + $0x68] sm:$0xff]
    %v223 = vld [vmem:[%s208 + $0x70] sm:$0xff]
    %v224 = vld [vmem:[%s208 + $0x78] sm:$0xff]
    %s225 = scalar_lea.vmem [#allocation8], 8
    %v226 = vld [vmem:[%s225] sm:$0xff]
    %227 = vmatpush.msra.mxu0 %v224
    %228 = vmatpush.msra.mxu0 %v223
    %229 = vmatpush.msra.mxu0 %v222
    %230 = vmatpush.msra.mxu0 %v221
    %231 = vmatpush.msra.mxu0 %v220
    %232 = vmatpush.msra.mxu0 %v219
    %233 = vmatpush.msra.mxu0 %v218
    %234 = vmatpush.msra.mxu0 %v217
    %235 = vmatpush.msra.mxu0 %v216
    %236 = vmatpush.msra.mxu0 %v215
    %237 = vmatpush.msra.mxu0 %v214
    %238 = vmatpush.msra.mxu0 %v213
    %239 = vmatpush.msra.mxu0 %v212
    %240 = vmatpush.msra.mxu0 %v211
    %241 = vmatpush.msra.mxu0 %v210
    %242 = vmatpush.msra.mxu0 %v209
    %243 = vmatmul.f32.gmra.mxu0 %v206
    %v244 = vpop.f32.mrf.mxu0
    %v245 = vadd.f32 0.0, %v244
    %246 = vmatmul.f32.gmra.mxu0 %v207
    %v247 = vpop.f32.mrf.mxu0
    %v248 = vadd.f32 0.0, %v247
    %249 = vdwg.mxu0
    %v250 = vperm.slane %v226, 0
    %251 = vmatpush.msra.mxu0 0.0
    %252 = vmatpush.msra.mxu0 0.0
    %253 = vmatpush.msra.mxu0 0.0
    %254 = vmatpush.msra.mxu0 0.0
    %255 = vmatpush.msra.mxu0 0.0
    %256 = vmatpush.msra.mxu0 0.0
    %257 = vmatpush.msra.mxu0 0.0
    %258 = vmatpush.msra.mxu0 0.0
    %259 = vmatpush.msra.mxu0 0.0
    %260 = vmatpush.msra.mxu0 0.0
    %261 = vmatpush.msra.mxu0 0.0
    %262 = vmatpush.msra.mxu0 0.0
    %263 = vmatpush.msra.mxu0 0.0
    %264 = vmatpush.msra.mxu0 0.0
    %265 = vmatpush.msra.mxu0 %v248
    %266 = vmatpush.msra.mxu0 %v245
    %267 = vmatmul.f32.gmra.mxu0 %v128
    %v268 = vpop.f32.mrf.mxu0
    %v269 = vadd.f32 %v250, %v268
    %270 = vmatmul.f32.gmra.mxu0 %v131
    %v271 = vpop.f32.mrf.mxu0
    %v272 = vadd.f32 %v250, %v271
    %273 = vdwg.mxu0
    %v274 = vmax.f32 %v269, 0.0
    %v275 = vmax.f32 %v272, 0.0
    %v276 = vadd.f32 %v274, %v275
    %v277 = vrot.slane %v276, 4
    %v278 = vadd.f32 %v276, %v277
    %v279 = vrot.slane %v278, 2
    %v280 = vadd.f32 %v278, %v279
    %v281 = vrot.slane %v280, 1
    %v282 = vadd.f32 %v280, %v281
    %v283 = vmul.f32 %v282, %v171
    %v284 = vsub.f32 %v274, %v283
    %v285 = vsub.f32 %v275, %v283
    %v286 = vmul.f32 %v284, %v284
    %v287 = vmul.f32 %v285, %v285
    %v288 = vadd.f32 %v286, %v287
    %v289 = vrot.slane %v288, 4
    %v290 = vadd.f32 %v288, %v289
    %v291 = vrot.slane %v290, 2
    %v292 = vadd.f32 %v290, %v291
    %v293 = vrot.slane %v292, 1
    %v294 = vadd.f32 %v292, %v293
    %v295 = vmul.f32 %v294, %v171
    %v296 = vadd.f32 %v295, 1e-05
    %v297 = vrsqrt.pop %v296
    %v298 = vmul.f32 %v297, %v296
    %v299 = vmul.f32 %v298, %v297
    %v300 = vmul.f32 0.5, %v299
    %v301 = vsub.f32 1.5, %v300
    %v302 = vmul.f32 %v297, %v301
    %vm303 = vweird.f32 %v296
    %vm304 = vweird.f32 %v297
    %vm305 = vmor %vm303, %vm304
    %v306 = vsel %vm305, %v297, %v302
    %v307 = vmul.f32 %v226, %v306
    %v308 = vperm.slane %v307, 1
    %v309 = vmul.f32 %v274, %v308
    %v310 = vmul.f32 %v275, %v308
    %v311 = vmul.f32 %v283, %v307
    %v313 = vrot.slane %v311, 7
    %v315 = vsub.f32 %v226, %v313
    %v316 = vperm.slane %v315, 2
    %v317 = vadd.f32 %v309, %v316
    %v318 = vadd.f32 %v310, %v316
    %s319 = scalar_lea.vmem [#allocation7], 256
    %v320 = vld [vmem:[%s319] sm:$0xff]
    %v321 = vld [vmem:[%s319 + $0x8] sm:$0xff]
    %v322 = vld [vmem:[%s319 + $0x10] sm:$0xff]
    %v323 = vld [vmem:[%s319 + $0x18] sm:$0xff]
    %v324 = vld [vmem:[%s319 + $0x20] sm:$0xff]
    %v325 = vld [vmem:[%s319 + $0x28] sm:$0xff]
    %v326 = vld [vmem:[%s319 + $0x30] sm:$0xff]
    %v327 = vld [vmem:[%s319 + $0x38] sm:$0xff]
    %v328 = vld [vmem:[%s319 + $0x40] sm:$0xff]
    %v329 = vld [vmem:[%s319 + $0x48] sm:$0xff]
    %v330 = vld [vmem:[%s319 + $0x50] sm:$0xff]
    %v331 = vld [vmem:[%s319 + $0x58] sm:$0xff]
    %v332 = vld [vmem:[%s319 + $0x60] sm:$0xff]
    %v333 = vld [vmem:[%s319 + $0x68] sm:$0xff]
    %v334 = vld [vmem:[%s319 + $0x70] sm:$0xff]
    %v335 = vld [vmem:[%s319 + $0x78] sm:$0xff]
    %s336 = scalar_lea.vmem [#allocation8], 16
    %v337 = vld [vmem:[%s336] sm:$0xff]
    %338 = vmatpush.msra.mxu0 %v335
    %339 = vmatpush.msra.mxu0 %v334
    %340 = vmatpush.msra.mxu0 %v333
    %341 = vmatpush.msra.mxu0 %v332
    %342 = vmatpush.msra.mxu0 %v331
    %343 = vmatpush.msra.mxu0 %v330
    %344 = vmatpush.msra.mxu0 %v329
    %345 = vmatpush.msra.mxu0 %v328
    %346 = vmatpush.msra.mxu0 %v327
    %347 = vmatpush.msra.mxu0 %v326
    %348 = vmatpush.msra.mxu0 %v325
    %349 = vmatpush.msra.mxu0 %v324
    %350 = vmatpush.msra.mxu0 %v323
    %351 = vmatpush.msra.mxu0 %v322
    %352 = vmatpush.msra.mxu0 %v321
    %353 = vmatpush.msra.mxu0 %v320
    %354 = vmatmul.f32.gmra.mxu0 %v317
    %v355 = vpop.f32.mrf.mxu0
    %v356 = vadd.f32 0.0, %v355
    %357 = vmatmul.f32.gmra.mxu0 %v318
    %v358 = vpop.f32.mrf.mxu0
    %v359 = vadd.f32 0.0, %v358
    %360 = vdwg.mxu0
    %v361 = vperm.slane %v337, 0
    %362 = vmatpush.msra.mxu0 0.0
    %363 = vmatpush.msra.mxu0 0.0
    %364 = vmatpush.msra.mxu0 0.0
    %365 = vmatpush.msra.mxu0 0.0
    %366 = vmatpush.msra.mxu0 0.0
    %367 = vmatpush.msra.mxu0 0.0
    %368 = vmatpush.msra.mxu0 0.0
    %369 = vmatpush.msra.mxu0 0.0
    %370 = vmatpush.msra.mxu0 0.0
    %371 = vmatpush.msra.mxu0 0.0
    %372 = vmatpush.msra.mxu0 0.0
    %373 = vmatpush.msra.mxu0 0.0
    %374 = vmatpush.msra.mxu0 0.0
    %375 = vmatpush.msra.mxu0 0.0
    %376 = vmatpush.msra.mxu0 %v359
    %377 = vmatpush.msra.mxu0 %v356
    %378 = vmatmul.f32.gmra.mxu0 %v128
    %v379 = vpop.f32.mrf.mxu0
    %v380 = vadd.f32 %v361, %v379
    %381 = vmatmul.f32.gmra.mxu0 %v131
    %v382 = vpop.f32.mrf.mxu0
    %v383 = vadd.f32 %v361, %v382
    %384 = vdwg.mxu0
    %v385 = vmax.f32 %v380, 0.0
    %v386 = vmax.f32 %v383, 0.0
    %v387 = vadd.f32 %v385, %v386
    %v388 = vrot.slane %v387, 4
    %v389 = vadd.f32 %v387, %v388
    %v390 = vrot.slane %v389, 2
    %v391 = vadd.f32 %v389, %v390
    %v392 = vrot.slane %v391, 1
    %v393 = vadd.f32 %v391, %v392
    %v394 = vmul.f32 %v393, %v171
    %v395 = vsub.f32 %v385, %v394
    %v396 = vsub.f32 %v386, %v394
    %v397 = vmul.f32 %v395, %v395
    %v398 = vmul.f32 %v396, %v396
    %v399 = vadd.f32 %v397, %v398
    %v400 = vrot.slane %v399, 4
    %v401 = vadd.f32 %v399, %v400
    %v402 = vrot.slane %v401, 2
    %v403 = vadd.f32 %v401, %v402
    %v404 = vrot.slane %v403, 1
    %v405 = vadd.f32 %v403, %v404
    %v406 = vmul.f32 %v405, %v171
    %v407 = vadd.f32 %v406, 1e-05
    %v408 = vrsqrt.pop %v407
    %v409 = vmul.f32 %v408, %v407
    %v410 = vmul.f32 %v409, %v408
    %v411 = vmul.f32 0.5, %v410
    %v412 = vsub.f32 1.5, %v411
    %v413 = vmul.f32 %v408, %v412
    %vm414 = vweird.f32 %v407
    %vm415 = vweird.f32 %v408
    %vm416 = vmor %vm414, %vm415
    %v417 = vsel %vm416, %v408, %v413
    %v418 = vmul.f32 %v337, %v417
    %v419 = vperm.slane %v418, 1
    %v420 = vmul.f32 %v385, %v419
    %v421 = vmul.f32 %v386, %v419
    %v422 = vmul.f32 %v394, %v418
    %v424 = vrot.slane %v422, 7
    %v426 = vsub.f32 %v337, %v424
    %v427 = vperm.slane %v426, 2
    %v428 = vadd.f32 %v420, %v427
    %v429 = vadd.f32 %v421, %v427
    %430 = vst [vmem:[#allocation10] sm:$0xff] %v428
    %431 = vst [vmem:[#allocation10 + $0x8] sm:$0xff] %v429
    // Predicated region
    $region34: #{tpu_custom_call.1} parent=1 // pred_check
      _
    $region35: #{tpu_custom_call.1} parent=1 // pred_check_branch
      %433 = sbr.rel (0) target = $region37
    $region36: #{tpu_custom_call.1} parent=1 // pred_region
      %435 = vsyncadd [#allocation4], 0
      %s436 = sshll.u32 [#allocation10], 4
      %s437 = int_to_ptr.vmem [resolvable:$true] %s436
      %s438 = sshll.u32 %s4, 4
      %s439 = int_to_ptr.hbm [resolvable:$true] %s438
      %444 = dma.vmem_to_hbm [thread:$0]  %s437, 256, %s439, [#allocation4], 128, 128, 8
    $region37: #{tpu_custom_call.1} parent=1 // pred_fallthru
      _
    // Predicated region
    $region38: #{tpu_custom_call.1} parent=1 // pred_check
      _
    $region39: #{tpu_custom_call.1} parent=1 // pred_check_branch
      %446 = sbr.rel (0) target = $region41
    $region40: #{tpu_custom_call.1} parent=1 // pred_region
      %448 = dma.done [#allocation4], 256
    $region41: #{tpu_custom_call.1} parent=1 // pred_fallthru
      _
    %449 = vsyncpa [#allocation3], 1
    %450 = vsyncpa [#allocation6], 1
    %451 = vsyncpa [#allocation9], 1
    %452 = vsyncpa [#allocation4], 1

</llo_original>
